<compile_context>
chip_gen: v7x
topology: tpu7x:2x2x1
jax: 0.10.0
libtpu: 0.0.40
codegen_flags: <defaults>
</compile_context>

<pallas_src>
import functools

import numpy as np

import jax
import jax.numpy as jnp
from jax.experimental import pallas as pl
from jax.experimental.pallas import tpu as pltpu


_VMEM_BUDGET = 10 * 1024 * 1024  # stay well under v5e's 16 MiB scoped-VMEM default


def _upsample_kernel(x_ref, r_ref, o_ref, *, s, num_pieces):
    # x_ref: (B, TH, W)        input dtype
    # r_ref: (TW, TW*s) bf16   0/1 block-diagonal lane-replication matrix
    # o_ref: (B, TH, s*W*s)    input dtype; o[b, t, k*W*s + j] == out[b, t*s+k, j]
    B, TH, W = x_ref.shape
    TW = r_ref.shape[0]
    Ws = W * s
    n_chunks = W // TW

    x2d = x_ref[...].reshape(B * TH, W)

    if num_pieces == 1:
        pieces = [x2d.astype(jnp.bfloat16)]
    else:
        # Exact bf16 multi-piece split: sum(pieces) == x bit-exactly for finite x.
        rem = x2d.astype(jnp.float32)
        pieces = []
        for _ in range(num_pieces - 1):
            p = rem.astype(jnp.bfloat16)
            pieces.append(p)
            rem = rem - p.astype(jnp.float32)
        pieces.append(rem.astype(jnp.bfloat16))

    rmat = r_ref[...]

    for c in range(n_chunks):
        lo, hi = c * TW, (c + 1) * TW
        # Copy-by-matmul: exact because values are bf16-representable, weights
        # are 0/1 and accumulation is f32.  Single f32 accumulator per chunk.
        acc = jnp.dot(pieces[0][:, lo:hi], rmat, preferred_element_type=jnp.float32)
        for p in pieces[1:]:
            acc = acc + jnp.dot(p[:, lo:hi], rmat, preferred_element_type=jnp.float32)
        chunk = acc.reshape(B, TH, TW * s).astype(o_ref.dtype)
        # Row repeat == writing the same vregs to s lane ranges of the
        # (NC, H, s*W*s) output view.
        for k in range(s):
            off = k * Ws + c * TW * s
            o_ref[:, :, off:off + TW * s] = chunk


@functools.lru_cache(maxsize=None)
def _replication_matrix_np(tw, s):
    # R[p, q] = 1 iff q // s == p  -> (tw, tw*s); exactly representable in bf16.
    q = np.arange(tw * s)
    return ((q // s)[None, :] == np.arange(tw)[:, None]).astype(np.float32)


def _largest_divisor_at_most(n, cap, multiple_of=1):
    best = 0
    t = multiple_of
    top = min(n, cap)
    while t <= top:
        if n % t == 0:
            best = t
        t += multiple_of
    return best


def _pick_row_tile(h, cap=128):
    if h <= cap:
        return h
    t = _largest_divisor_at_most(h, cap, multiple_of=8)
    if t:
        return t
    # Awkward H (no divisor that is a multiple of 8): take whole-H rows rather
    # than degenerate 1-row tiles.
    # TODO(synk): replace divisor tiling with a pl.when-guarded ragged tail.
    return h


def _vmem_estimate(b, th, w, s, itemsize, num_pieces, tw):
    in_blk = b * th * w * itemsize
    out_blk = b * th * w * s * s * itemsize
    pipeline = 2 * (in_blk + out_blk)               # double-buffered data blocks
    temps = b * th * w * (4 + 2 * num_pieces)       # f32 remainder + bf16 pieces
    temps += b * th * tw * s * (4 + itemsize)       # per-chunk f32 acc + cast copy
    rmat = 2 * tw * tw * s * 2                      # (double-buffered) bf16 R block
    return pipeline + temps + rmat


def _shrink_row_tile(th, w, s, itemsize, num_pieces, tw):
    # Keep the (single-NC-slab) working set within budget; only halve while the
    # result stays a multiple of 8 (layout rule for the second-minor block dim).
    while (th > 8 and th % 16 == 0 and
           _vmem_estimate(1, th, w, s, itemsize, num_pieces, tw) > _VMEM_BUDGET):
        th //= 2
    return th


def _pick_nc_block(nc, th, w, s, itemsize, num_pieces, tw):
    best = 1
    cap = min(nc, 32)
    for b in range(1, cap + 1):
        if nc % b:
            continue
        if b > 1 and th % 8 != 0:
            continue  # avoid non-trivial (B, TH) -> (B*TH) relayouts
        if _vmem_estimate(b, th, w, s, itemsize, num_pieces, tw) <= _VMEM_BUDGET:
            best = b
    return best


def upsample_nearest(x, scale_factor):
    """Pallas-TPU equivalent of F.interpolate(x, scale_factor, mode='nearest').

    x: [N, C, H, W]; scale_factor: positive integer.  Returns [N, C, H*s, W*s].
    """
    s = int(scale_factor)
    if s != scale_factor or s < 1:
        raise NotImplementedError("only positive integer scale factors are supported")
    if not jnp.issubdtype(x.dtype, jnp.floating):
        # TODO(synk): integer/bool nearest-upsample path (PyTorch supports it).
        raise NotImplementedError("only floating dtypes are supported")

    N, C, H, W = x.shape
    if s == 1:
        return x

    if x.dtype == jnp.bfloat16:
        num_pieces = 1          # values already bf16-exact: single matmul
    elif x.dtype == jnp.float16:
        num_pieces = 2          # 11 significand bits fit in two bf16 pieces
    elif x.dtype == jnp.float32:
        num_pieces = 3          # exact bf16x3 split (24 significand bits)
    else:
        raise NotImplementedError(f"unsupported dtype {x.dtype}")

    itemsize = jnp.dtype(x.dtype).itemsize
    NC = N * C

    TW = _largest_divisor_at_most(W, 256) or W          # R-matmul lane chunk
    TH = _pick_row_tile(H)
    TH = _shrink_row_tile(TH, W, s, itemsize, num_pieces, TW)
    B = _pick_nc_block(NC, TH, W, s, itemsize, num_pieces, TW)

    x3 = x.reshape(NC, H, W)
    rmat = jnp.asarray(_replication_matrix_np(TW, s), dtype=jnp.bfloat16)

    kernel = functools.partial(_upsample_kernel, s=s, num_pieces=num_pieces)

    out3 = pl.pallas_call(
        kernel,
        out_shape=jax.ShapeDtypeStruct((NC, H, s * W * s), x.dtype),
        grid=(NC // B, H // TH),
        in_specs=[
            pl.BlockSpec((B, TH, W), lambda i, h: (i, h, 0)),
            pl.BlockSpec((TW, TW * s), lambda i, h: (0, 0)),
        ],
        out_specs=pl.BlockSpec((B, TH, s * W * s), lambda i, h: (i, h, 0)),
        compiler_params=pltpu.CompilerParams(
            dimension_semantics=("parallel", "parallel"),
        ),
    )(x3, rmat)

    # (NC, H, s*W*s) is a contiguous row-major view of (N, C, H*s, W*s).
    return out3.reshape(N, C, H * s, W * s)


class UpSample:
    """Mirror of the PyTorch module (nearest mode only)."""

    def __init__(self, scale_factor, mode="nearest"):
        if mode != "nearest":
            # TODO(synk): only 'nearest' mode is implemented; 'bilinear' etc. are not.
            raise NotImplementedError("only mode='nearest' is supported")
        self.scale_factor = scale_factor
        self.mode = mode

    def __call__(self, x):
        return upsample_nearest(x, self.scale_factor)


def upsample_nearest_ref(x, s):
    """Pure-JAX reference matching F.interpolate(mode='nearest', integer scale)."""
    return jnp.repeat(jnp.repeat(x, s, axis=2), s, axis=3)


if __name__ == "__main__":
    key = jax.random.PRNGKey(0)
    x = jax.random.normal(key, (2, 4, 16, 16), dtype=jnp.float32)

    model = UpSample(scale_factor=2, mode="nearest")
    out = jax.block_until_ready(model(x))

    ref = upsample_nearest_ref(x, 2)
    assert out.shape == (2, 4, 32, 32), out.shape
    assert jnp.allclose(out, ref, atol=1e-6, rtol=1e-6), "f32 mismatch vs reference"

    # Also exercise the single-piece bf16 fast path.
    xb = x.astype(jnp.bfloat16)
    outb = jax.block_until_ready(model(xb))
    refb = upsample_nearest_ref(xb, 2)
    assert outb.dtype == jnp.bfloat16 and outb.shape == (2, 4, 32, 32)
    assert jnp.allclose(outb.astype(jnp.float32), refb.astype(jnp.float32),
                        atol=1e-6, rtol=1e-6), "bf16 mismatch vs reference"

    print("KERNEL_OK")
</pallas_src>

<mosaic_0001>
module attributes {stable_mosaic.version = 11 : i64} {
  func.func @_upsample_kernel(%arg0: i32, %arg1: i32, %arg2: memref<8x16x16xf32, #tpu.memory_space<vmem>>, %arg3: memref<16x32xbf16, #tpu.memory_space<vmem>>, %arg4: memref<8x16x64xf32, #tpu.memory_space<vmem>>) attributes {dimension_semantics = [#tpu.dimension_semantics<parallel>, #tpu.dimension_semantics<parallel>], iteration_bounds = array<i64: 1, 1>, scalar_prefetch = 0 : i64, scratch_operands = 0 : i64, tpu.core_type = #tpu.core_type<tc>, window_params = [{transform_indices = @transform_0, window_bounds = array<i64: 8, 16, 16>}, {pipeline_mode = #tpu.pipeline_mode<synchronous>, transform_indices = @transform_1, window_bounds = array<i64: 16, 32>}, {transform_indices = @transform_2, window_bounds = array<i64: 8, 16, 64>}]} {
    %c0 = arith.constant 0 : index
    %c0_0 = arith.constant 0 : index
    %c0_1 = arith.constant 0 : index
    %0 = vector.load %arg2[%c0, %c0_0, %c0_1] : memref<8x16x16xf32, #tpu.memory_space<vmem>>, vector<8x16x16xf32>
    %1 = vector.shape_cast %0 : vector<8x16x16xf32> to vector<128x16xf32>
    %2 = arith.truncf %1 : vector<128x16xf32> to vector<128x16xbf16>
    %3 = arith.extf %2 : vector<128x16xbf16> to vector<128x16xf32>
    %4 = arith.subf %1, %3 : vector<128x16xf32>
    %5 = arith.truncf %4 : vector<128x16xf32> to vector<128x16xbf16>
    %6 = arith.extf %5 : vector<128x16xbf16> to vector<128x16xf32>
    %7 = arith.subf %4, %6 : vector<128x16xf32>
    %8 = arith.truncf %7 : vector<128x16xf32> to vector<128x16xbf16>
    %c0_2 = arith.constant 0 : index
    %c0_3 = arith.constant 0 : index
    %9 = vector.load %arg3[%c0_2, %c0_3] : memref<16x32xbf16, #tpu.memory_space<vmem>>, vector<16x32xbf16>
    %cst = arith.constant dense<0.000000e+00> : vector<128x32xf32>
    %10 = tpu.matmul %2, %9, %cst {dimension_numbers = #tpu.dot_dimension_numbers<[1], [0], [0], [1], [0, 0, 1, 1], [], []>} : vector<128x16xbf16>, vector<16x32xbf16>, vector<128x32xf32> -> vector<128x32xf32>
    %cst_4 = arith.constant dense<0.000000e+00> : vector<128x32xf32>
    %11 = tpu.matmul %5, %9, %cst_4 {dimension_numbers = #tpu.dot_dimension_numbers<[1], [0], [0], [1], [0, 0, 1, 1], [], []>} : vector<128x16xbf16>, vector<16x32xbf16>, vector<128x32xf32> -> vector<128x32xf32>
    %12 = arith.addf %10, %11 : vector<128x32xf32>
    %cst_5 = arith.constant dense<0.000000e+00> : vector<128x32xf32>
    %13 = tpu.matmul %8, %9, %cst_5 {dimension_numbers = #tpu.dot_dimension_numbers<[1], [0], [0], [1], [0, 0, 1, 1], [], []>} : vector<128x16xbf16>, vector<16x32xbf16>, vector<128x32xf32> -> vector<128x32xf32>
    %14 = arith.addf %12, %13 : vector<128x32xf32>
    %15 = vector.shape_cast %14 : vector<128x32xf32> to vector<8x16x32xf32>
    %c0_6 = arith.constant 0 : index
    %c0_7 = arith.constant 0 : index
    %c0_8 = arith.constant 0 : index
    %16 = vector.load %arg4[%c0_6, %c0_7, %c0_8] : memref<8x16x64xf32, #tpu.memory_space<vmem>>, vector<8x16x32xf32>
    tpu.vector_store %arg4[%c0_6, %c0_7, %c0_8], %15 {strides = array<i32>} : memref<8x16x64xf32, #tpu.memory_space<vmem>>, vector<8x16x32xf32>,
    %c0_9 = arith.constant 0 : index
    %c0_10 = arith.constant 0 : index
    %c32 = arith.constant 32 : index
    %17 = vector.load %arg4[%c0_9, %c0_10, %c32] : memref<8x16x64xf32, #tpu.memory_space<vmem>>, vector<8x16x32xf32>
    tpu.vector_store %arg4[%c0_9, %c0_10, %c32], %15 {strides = array<i32>} : memref<8x16x64xf32, #tpu.memory_space<vmem>>, vector<8x16x32xf32>,
    return
  }
  func.func @transform_0(%arg0: i32, %arg1: i32) -> (i32, i32, i32) {
    %c0_i32 = arith.constant 0 : i32
    %c0_i32_0 = arith.constant 0 : i32
    return %arg0, %arg1, %c0_i32 : i32, i32, i32
  }
  func.func @transform_1(%arg0: i32, %arg1: i32) -> (i32, i32) {
    %c0_i32 = arith.constant 0 : i32
    %c0_i32_0 = arith.constant 0 : i32
    %c0_i32_1 = arith.constant 0 : i32
    return %c0_i32, %c0_i32_0 : i32, i32
  }
  func.func @transform_2(%arg0: i32, %arg1: i32) -> (i32, i32, i32) {
    %c0_i32 = arith.constant 0 : i32
    %c0_i32_0 = arith.constant 0 : i32
    return %arg0, %arg1, %c0_i32 : i32, i32, i32
  }
}

</mosaic_0001>

<llo_original>
// kernel: tpu_custom_call.1
$region0: #{tpu_custom_call.1}
  #allocation0 [shape = 'u32[]', space=smem, size = 0x4, offset = 0x4, fixed_abs, tag = 'smem constant byte address 0x4 - core index']
  #allocation1 [shape = 'u32[144,128]{1,0:T(1,128)}', space=vmem, size = 0x12000, scoped, tag = 'internal scratch']
  %s0 = inlined_call_operand.hbm [shape: f32[8,16,16], index: 0, kind: input, shape index: {}]
  %s1 = inlined_call_operand.hbm [shape: bf16[16,32], index: 1, kind: input, shape index: {}]
  %s2 = inlined_call_operand.hbm [shape: f32[8,16,64], index: 2, kind: output, shape index: {}]
  %s3 = sld [smem:[#allocation0]]
  $region26: #{tpu_custom_call.1} parent=0
    _
  %s5 = ssub.s32 1, %s3
  %s6 = scalar_select 0, %s5, %s3
  $region1: #{tpu_custom_call.1} parent=0
    #allocation2 [shape = 'u8[65536]{0}', space=vmem, size = 0x10000, scoped, tag = 'input window, operand 0, single buffered']
    #allocation3 [shape = 's32[1]{0}', space=sflag, size = 0x4, scoped, tag = 'scoped memory for tpu_custom_call.1']
    #allocation4 [shape = 's32[1]{0}', space=sflag, size = 0x4, scoped, tag = 'scoped memory for tpu_custom_call.1']
    #allocation5 [shape = 'u8[4096]{0}', space=vmem, size = 0x1000, scoped, tag = 'input window, operand 1, single buffered']
    #allocation6 [shape = 's32[1]{0}', space=sflag, size = 0x4, scoped, tag = 'scoped memory for tpu_custom_call.1']
    #allocation7 [shape = 'u8[65536]{0}', space=vmem, size = 0x10000, scoped, tag = 'output window, operand 0, single buffered']
    %7 = vsyncpa [#allocation3], 0
    %8 = vsyncpa [#allocation6], 0
    %9 = vsyncpa [#allocation4], 0
    // Predicated region
    $region2: #{tpu_custom_call.1} parent=1 // pred_check
      _
    $region3: #{tpu_custom_call.1} parent=1 // pred_check_branch
      %11 = sbr.rel (0) target = $region5
    $region4: #{tpu_custom_call.1} parent=1 // pred_region
      %s13 = ssub.s32 2048, 2048
      %14 = vsyncadd [#allocation3], %s13
      %s15 = sshll.u32 [#allocation2], 4
      %s16 = int_to_ptr.vmem [resolvable:$true] %s15
      %21 = dma.hbm_to_vmem [thread:$0]  %s0, 2048, %s16, [#allocation3], 128, 128, 8
    $region5: #{tpu_custom_call.1} parent=1 // pred_fallthru
      _
    // Predicated region
    $region6: #{tpu_custom_call.1} parent=1 // pred_check
      _
    $region7: #{tpu_custom_call.1} parent=1 // pred_check_branch
      %23 = sbr.rel (0) target = $region9
    $region8: #{tpu_custom_call.1} parent=1 // pred_region
      %s25 = ssub.s32 128, 128
      %26 = vsyncadd [#allocation6], %s25
      %s27 = sshll.u32 [#allocation5], 4
      %s28 = int_to_ptr.vmem [resolvable:$true] %s27
      %33 = dma.hbm_to_vmem [thread:$0]  %s1, 128, %s28, [#allocation6], 64, 64, 4
    $region9: #{tpu_custom_call.1} parent=1 // pred_fallthru
      _
    // Predicated region
    $region10: #{tpu_custom_call.1} parent=1 // pred_check
      _
    $region11: #{tpu_custom_call.1} parent=1 // pred_check_branch
      %35 = sbr.rel (0) target = $region13
    $region12: #{tpu_custom_call.1} parent=1 // pred_region
      %36 = dma.done [#allocation3], 2048
    $region13: #{tpu_custom_call.1} parent=1 // pred_fallthru
      _
    // Predicated region
    $region14: #{tpu_custom_call.1} parent=1 // pred_check
      _
    $region15: #{tpu_custom_call.1} parent=1 // pred_check_branch
      %38 = sbr.rel (0) target = $region17
    $region16: #{tpu_custom_call.1} parent=1 // pred_region
      %39 = dma.done [#allocation6], 128
    $region17: #{tpu_custom_call.1} parent=1 // pred_fallthru
      _
    %v41 = vld [vmem:[#allocation2] sm:$0xff]
    %v42 = vld [vmem:[#allocation2 + $0x8] sm:$0xff]
    %v43 = vld [vmem:[#allocation2 + $0x10] sm:$0xff]
    %v44 = vld [vmem:[#allocation2 + $0x18] sm:$0xff]
    %v45 = vld [vmem:[#allocation2 + $0x20] sm:$0xff]
    %v46 = vld [vmem:[#allocation2 + $0x28] sm:$0xff]
    %v47 = vld [vmem:[#allocation2 + $0x30] sm:$0xff]
    %v48 = vld [vmem:[#allocation2 + $0x38] sm:$0xff]
    %v49 = vld [vmem:[#allocation2 + $0x40] sm:$0xff]
    %v50 = vld [vmem:[#allocation2 + $0x48] sm:$0xff]
    %v51 = vld [vmem:[#allocation2 + $0x50] sm:$0xff]
    %v52 = vld [vmem:[#allocation2 + $0x58] sm:$0xff]
    %v53 = vld [vmem:[#allocation2 + $0x60] sm:$0xff]
    %v54 = vld [vmem:[#allocation2 + $0x68] sm:$0xff]
    %v55 = vld [vmem:[#allocation2 + $0x70] sm:$0xff]
    %v56 = vld [vmem:[#allocation2 + $0x78] sm:$0xff]
    %v57 = vpack.c.bf16 %v42, %v41
    %v58 = vpack.c.bf16 %v44, %v43
    %v59 = vpack.c.bf16 %v46, %v45
    %v60 = vpack.c.bf16 %v48, %v47
    %v61 = vpack.c.bf16 %v50, %v49
    %v62 = vpack.c.bf16 %v52, %v51
    %v63 = vpack.c.bf16 %v54, %v53
    %v64 = vpack.c.bf16 %v56, %v55
    %v65 = vunpack.c.l.bf16 %v57
    %v66 = vunpack.c.h.bf16 %v57
    %v67 = vunpack.c.l.bf16 %v58
    %v68 = vunpack.c.h.bf16 %v58
    %v69 = vunpack.c.l.bf16 %v59
    %v70 = vunpack.c.h.bf16 %v59
    %v71 = vunpack.c.l.bf16 %v60
    %v72 = vunpack.c.h.bf16 %v60
    %v73 = vunpack.c.l.bf16 %v61
    %v74 = vunpack.c.h.bf16 %v61
    %v75 = vunpack.c.l.bf16 %v62
    %v76 = vunpack.c.h.bf16 %v62
    %v77 = vunpack.c.l.bf16 %v63
    %v78 = vunpack.c.h.bf16 %v63
    %v79 = vunpack.c.l.bf16 %v64
    %v80 = vunpack.c.h.bf16 %v64
    %v81 = vsub.f32 %v41, %v65
    %v82 = vsub.f32 %v42, %v66
    %v83 = vsub.f32 %v43, %v67
    %v84 = vsub.f32 %v44, %v68
    %v85 = vsub.f32 %v45, %v69
    %v86 = vsub.f32 %v46, %v70
    %v87 = vsub.f32 %v47, %v71
    %v88 = vsub.f32 %v48, %v72
    %v89 = vsub.f32 %v49, %v73
    %v90 = vsub.f32 %v50, %v74
    %v91 = vsub.f32 %v51, %v75
    %v92 = vsub.f32 %v52, %v76
    %v93 = vsub.f32 %v53, %v77
    %v94 = vsub.f32 %v54, %v78
    %v95 = vsub.f32 %v55, %v79
    %v96 = vsub.f32 %v56, %v80
    %v97 = vpack.c.bf16 %v82, %v81
    %v98 = vpack.c.bf16 %v84, %v83
    %v99 = vpack.c.bf16 %v86, %v85
    %v100 = vpack.c.bf16 %v88, %v87
    %v101 = vpack.c.bf16 %v90, %v89
    %v102 = vpack.c.bf16 %v92, %v91
    %v103 = vpack.c.bf16 %v94, %v93
    %v104 = vpack.c.bf16 %v96, %v95
    %v105 = vunpack.c.l.bf16 %v97
    %v106 = vunpack.c.h.bf16 %v97
    %v107 = vunpack.c.l.bf16 %v98
    %v108 = vunpack.c.h.bf16 %v98
    %v109 = vunpack.c.l.bf16 %v99
    %v110 = vunpack.c.h.bf16 %v99
    %v111 = vunpack.c.l.bf16 %v100
    %v112 = vunpack.c.h.bf16 %v100
    %v113 = vunpack.c.l.bf16 %v101
    %v114 = vunpack.c.h.bf16 %v101
    %v115 = vunpack.c.l.bf16 %v102
    %v116 = vunpack.c.h.bf16 %v102
    %v117 = vunpack.c.l.bf16 %v103
    %v118 = vunpack.c.h.bf16 %v103
    %v119 = vunpack.c.l.bf16 %v104
    %v120 = vunpack.c.h.bf16 %v104
    %v121 = vsub.f32 %v81, %v105
    %v122 = vsub.f32 %v82, %v106
    %v123 = vsub.f32 %v83, %v107
    %v124 = vsub.f32 %v84, %v108
    %v125 = vsub.f32 %v85, %v109
    %v126 = vsub.f32 %v86, %v110
    %v127 = vsub.f32 %v87, %v111
    %v128 = vsub.f32 %v88, %v112
    %v129 = vsub.f32 %v89, %v113
    %v130 = vsub.f32 %v90, %v114
    %v131 = vsub.f32 %v91, %v115
    %v132 = vsub.f32 %v92, %v116
    %v133 = vsub.f32 %v93, %v117
    %v134 = vsub.f32 %v94, %v118
    %v135 = vsub.f32 %v95, %v119
    %v136 = vsub.f32 %v96, %v120
    %v137 = vpack.c.bf16 %v122, %v121
    %v138 = vpack.c.bf16 %v124, %v123
    %v139 = vpack.c.bf16 %v126, %v125
    %v140 = vpack.c.bf16 %v128, %v127
    %v141 = vpack.c.bf16 %v130, %v129
    %v142 = vpack.c.bf16 %v132, %v131
    %v143 = vpack.c.bf16 %v134, %v133
    %v144 = vpack.c.bf16 %v136, %v135
    %v145 = vld [vmem:[#allocation5] sm:$0xf]
    %v146 = vld [vmem:[#allocation5 + $0x4] sm:$0xf]
    %v149 = vunpack.c.l.b16 %v145
    %v150 = vunpack.c.l.b16 %v146
    %v151 = vpack.c.b16 %v150, %v149
    %vm153 = vcmask 130048
    %v155 = vsel %vm153, %v97, 0
    %v158 = vsel %vm153, %v98, 0
    %v161 = vsel %vm153, %v99, 0
    %v164 = vsel %vm153, %v100, 0
    %v167 = vsel %vm153, %v101, 0
    %v170 = vsel %vm153, %v102, 0
    %v173 = vsel %vm153, %v103, 0
    %v176 = vsel %vm153, %v104, 0
    %178 = vmatprep.subr.bf16.mxu0 0
    %179 = vmatpush1.bf16.msra.mxu0 %v151
    %180 = vmatprep.subr.bf16.mxu0 0
    %181 = vmatpush1.bf16.msra.mxu0 0
    %182 = vmatprep.subr.bf16.mxu0 0
    %183 = vmatpush1.bf16.msra.mxu0 0
    %184 = vmatprep.subr.bf16.mxu0 0
    %185 = vmatpush1.bf16.msra.mxu0 0
    %186 = vmatprep.subr.bf16.mxu0 0
    %187 = vmatpush1.bf16.msra.mxu0 0
    %188 = vmatprep.subr.bf16.mxu0 0
    %189 = vmatpush1.bf16.msra.mxu0 0
    %190 = vmatprep.subr.bf16.mxu0 0
    %191 = vmatpush1.bf16.msra.mxu0 0
    %192 = vmatprep.subr.bf16.mxu0 0
    %193 = vmatpush1.bf16.msra.mxu0 0
    %194 = vmatprep.subr.bf16.mxu0 0
    %195 = vmatpush1.bf16.msra.mxu0 0
    %196 = vmatprep.subr.bf16.mxu0 0
    %197 = vmatpush1.bf16.msra.mxu0 0
    %198 = vmatprep.subr.bf16.mxu0 0
    %199 = vmatpush1.bf16.msra.mxu0 0
    %200 = vmatprep.subr.bf16.mxu0 0
    %201 = vmatpush1.bf16.msra.mxu0 0
    %202 = vmatprep.subr.bf16.mxu0 0
    %203 = vmatpush1.bf16.msra.mxu0 0
    %204 = vmatprep.subr.bf16.mxu0 0
    %205 = vmatpush1.bf16.msra.mxu0 0
    %206 = vmatprep.subr.bf16.mxu0 0
    %207 = vmatpush1.bf16.msra.mxu0 0
    %208 = vmatprep.subr.bf16.mxu0 0
    %209 = vmatpush1.bf16.msra.mxu0 0
    %210 = vmatprep.mubr.bf16.mxu0 0
    %211 = vmatmul.mubr.bf16.gmra.mrb[0].mxu0 %v155
    %v212 = vpop.f32.mrb[0].mxu0
    %v213 = vadd.f32 0.0, %v212
    %v214 = vpop.f32.mrb[0].mxu0
    %v215 = vpop.f32.mrb[0].mxu0
    %v216 = vadd.f32 0.0, %v215
    %v217 = vpop.f32.mrb[0].mxu0
    %218 = vmatprep.mubr.bf16.mxu0 0
    %219 = vmatmul.mubr.bf16.gmra.mrb[0].mxu0 %v158
    %v220 = vpop.f32.mrb[0].mxu0
    %v221 = vadd.f32 0.0, %v220
    %v222 = vpop.f32.mrb[0].mxu0
    %v223 = vpop.f32.mrb[0].mxu0
    %v224 = vadd.f32 0.0, %v223
    %v225 = vpop.f32.mrb[0].mxu0
    %226 = vmatprep.mubr.bf16.mxu0 0
    %227 = vmatmul.mubr.bf16.gmra.mrb[0].mxu0 %v161
    %v228 = vpop.f32.mrb[0].mxu0
    %v229 = vadd.f32 0.0, %v228
    %v230 = vpop.f32.mrb[0].mxu0
    %v231 = vpop.f32.mrb[0].mxu0
    %v232 = vadd.f32 0.0, %v231
    %v233 = vpop.f32.mrb[0].mxu0
    %234 = vmatprep.mubr.bf16.mxu0 0
    %235 = vmatmul.mubr.bf16.gmra.mrb[0].mxu0 %v164
    %v236 = vpop.f32.mrb[0].mxu0
    %v237 = vadd.f32 0.0, %v236
    %v238 = vpop.f32.mrb[0].mxu0
    %v239 = vpop.f32.mrb[0].mxu0
    %v240 = vadd.f32 0.0, %v239
    %v241 = vpop.f32.mrb[0].mxu0
    %242 = vmatprep.mubr.bf16.mxu0 0
    %243 = vmatmul.mubr.bf16.gmra.mrb[0].mxu0 %v167
    %v244 = vpop.f32.mrb[0].mxu0
    %v245 = vadd.f32 0.0, %v244
    %v246 = vpop.f32.mrb[0].mxu0
    %v247 = vpop.f32.mrb[0].mxu0
    %v248 = vadd.f32 0.0, %v247
    %v249 = vpop.f32.mrb[0].mxu0
    %250 = vmatprep.mubr.bf16.mxu0 0
    %251 = vmatmul.mubr.bf16.gmra.mrb[0].mxu0 %v170
    %v252 = vpop.f32.mrb[0].mxu0
    %v253 = vadd.f32 0.0, %v252
    %v254 = vpop.f32.mrb[0].mxu0
    %v255 = vpop.f32.mrb[0].mxu0
    %v256 = vadd.f32 0.0, %v255
    %v257 = vpop.f32.mrb[0].mxu0
    %258 = vmatprep.mubr.bf16.mxu0 0
    %259 = vmatmul.mubr.bf16.gmra.mrb[0].mxu0 %v173
    %v260 = vpop.f32.mrb[0].mxu0
    %v261 = vadd.f32 0.0, %v260
    %v262 = vpop.f32.mrb[0].mxu0
    %v263 = vpop.f32.mrb[0].mxu0
    %v264 = vadd.f32 0.0, %v263
    %v265 = vpop.f32.mrb[0].mxu0
    %266 = vmatprep.mubr.bf16.mxu0 0
    %267 = vmatmul.mubr.bf16.gmra.mrb[0].mxu0 %v176
    %v268 = vpop.f32.mrb[0].mxu0
    %v269 = vadd.f32 0.0, %v268
    %v270 = vpop.f32.mrb[0].mxu0
    %v271 = vpop.f32.mrb[0].mxu0
    %v272 = vadd.f32 0.0, %v271
    %v273 = vpop.f32.mrb[0].mxu0
    %274 = vdwg.mxu0
    %v276 = vsel %vm153, %v57, 0
    %v279 = vsel %vm153, %v58, 0
    %v282 = vsel %vm153, %v59, 0
    %v285 = vsel %vm153, %v60, 0
    %v288 = vsel %vm153, %v61, 0
    %v291 = vsel %vm153, %v62, 0
    %v294 = vsel %vm153, %v63, 0
    %v297 = vsel %vm153, %v64, 0
    %299 = vmatprep.subr.bf16.mxu0 0
    %300 = vmatpush1.bf16.msra.mxu0 %v151
    %301 = vmatprep.subr.bf16.mxu0 0
    %302 = vmatpush1.bf16.msra.mxu0 0
    %303 = vmatprep.subr.bf16.mxu0 0
    %304 = vmatpush1.bf16.msra.mxu0 0
    %305 = vmatprep.subr.bf16.mxu0 0
    %306 = vmatpush1.bf16.msra.mxu0 0
    %307 = vmatprep.subr.bf16.mxu0 0
    %308 = vmatpush1.bf16.msra.mxu0 0
    %309 = vmatprep.subr.bf16.mxu0 0
    %310 = vmatpush1.bf16.msra.mxu0 0
    %311 = vmatprep.subr.bf16.mxu0 0
    %312 = vmatpush1.bf16.msra.mxu0 0
    %313 = vmatprep.subr.bf16.mxu0 0
    %314 = vmatpush1.bf16.msra.mxu0 0
    %315 = vmatprep.subr.bf16.mxu0 0
    %316 = vmatpush1.bf16.msra.mxu0 0
    %317 = vmatprep.subr.bf16.mxu0 0
    %318 = vmatpush1.bf16.msra.mxu0 0
    %319 = vmatprep.subr.bf16.mxu0 0
    %320 = vmatpush1.bf16.msra.mxu0 0
    %321 = vmatprep.subr.bf16.mxu0 0
    %322 = vmatpush1.bf16.msra.mxu0 0
    %323 = vmatprep.subr.bf16.mxu0 0
    %324 = vmatpush1.bf16.msra.mxu0 0
    %325 = vmatprep.subr.bf16.mxu0 0
    %326 = vmatpush1.bf16.msra.mxu0 0
    %327 = vmatprep.subr.bf16.mxu0 0
    %328 = vmatpush1.bf16.msra.mxu0 0
    %329 = vmatprep.subr.bf16.mxu0 0
    %330 = vmatpush1.bf16.msra.mxu0 0
    %331 = vmatprep.mubr.bf16.mxu0 0
    %332 = vmatmul.mubr.bf16.gmra.mrb[0].mxu0 %v276
    %v333 = vpop.f32.mrb[0].mxu0
    %v334 = vadd.f32 %v213, %v333
    %v335 = vpop.f32.mrb[0].mxu0
    %v336 = vpop.f32.mrb[0].mxu0
    %v337 = vadd.f32 %v216, %v336
    %v338 = vpop.f32.mrb[0].mxu0
    %339 = vmatprep.mubr.bf16.mxu0 0
    %340 = vmatmul.mubr.bf16.gmra.mrb[0].mxu0 %v279
    %v341 = vpop.f32.mrb[0].mxu0
    %v342 = vadd.f32 %v221, %v341
    %v343 = vpop.f32.mrb[0].mxu0
    %v344 = vpop.f32.mrb[0].mxu0
    %v345 = vadd.f32 %v224, %v344
    %v346 = vpop.f32.mrb[0].mxu0
    %347 = vmatprep.mubr.bf16.mxu0 0
    %348 = vmatmul.mubr.bf16.gmra.mrb[0].mxu0 %v282
    %v349 = vpop.f32.mrb[0].mxu0
    %v350 = vadd.f32 %v229, %v349
    %v351 = vpop.f32.mrb[0].mxu0
    %v352 = vpop.f32.mrb[0].mxu0
    %v353 = vadd.f32 %v232, %v352
    %v354 = vpop.f32.mrb[0].mxu0
    %355 = vmatprep.mubr.bf16.mxu0 0
    %356 = vmatmul.mubr.bf16.gmra.mrb[0].mxu0 %v285
    %v357 = vpop.f32.mrb[0].mxu0
    %v358 = vadd.f32 %v237, %v357
    %v359 = vpop.f32.mrb[0].mxu0
    %v360 = vpop.f32.mrb[0].mxu0
    %v361 = vadd.f32 %v240, %v360
    %v362 = vpop.f32.mrb[0].mxu0
    %363 = vmatprep.mubr.bf16.mxu0 0
    %364 = vmatmul.mubr.bf16.gmra.mrb[0].mxu0 %v288
    %v365 = vpop.f32.mrb[0].mxu0
    %v366 = vadd.f32 %v245, %v365
    %v367 = vpop.f32.mrb[0].mxu0
    %v368 = vpop.f32.mrb[0].mxu0
    %v369 = vadd.f32 %v248, %v368
    %v370 = vpop.f32.mrb[0].mxu0
    %371 = vmatprep.mubr.bf16.mxu0 0
    %372 = vmatmul.mubr.bf16.gmra.mrb[0].mxu0 %v291
    %v373 = vpop.f32.mrb[0].mxu0
    %v374 = vadd.f32 %v253, %v373
    %v375 = vpop.f32.mrb[0].mxu0
    %v376 = vpop.f32.mrb[0].mxu0
    %v377 = vadd.f32 %v256, %v376
    %v378 = vpop.f32.mrb[0].mxu0
    %379 = vmatprep.mubr.bf16.mxu0 0
    %380 = vmatmul.mubr.bf16.gmra.mrb[0].mxu0 %v294
    %v381 = vpop.f32.mrb[0].mxu0
    %v382 = vadd.f32 %v261, %v381
    %v383 = vpop.f32.mrb[0].mxu0
    %v384 = vpop.f32.mrb[0].mxu0
    %v385 = vadd.f32 %v264, %v384
    %v386 = vpop.f32.mrb[0].mxu0
    %387 = vmatprep.mubr.bf16.mxu0 0
    %388 = vmatmul.mubr.bf16.gmra.mrb[0].mxu0 %v297
    %v389 = vpop.f32.mrb[0].mxu0
    %v390 = vadd.f32 %v269, %v389
    %v391 = vpop.f32.mrb[0].mxu0
    %v392 = vpop.f32.mrb[0].mxu0
    %v393 = vadd.f32 %v272, %v392
    %v394 = vpop.f32.mrb[0].mxu0
    %395 = vdwg.mxu0
    %v397 = vsel %vm153, %v137, 0
    %v400 = vsel %vm153, %v138, 0
    %v403 = vsel %vm153, %v139, 0
    %v406 = vsel %vm153, %v140, 0
    %v409 = vsel %vm153, %v141, 0
    %v412 = vsel %vm153, %v142, 0
    %v415 = vsel %vm153, %v143, 0
    %v418 = vsel %vm153, %v144, 0
    %420 = vmatprep.subr.bf16.mxu0 0
    %421 = vmatpush1.bf16.msra.mxu0 %v151
    %422 = vmatprep.subr.bf16.mxu0 0
    %423 = vmatpush1.bf16.msra.mxu0 0
    %424 = vmatprep.subr.bf16.mxu0 0
    %425 = vmatpush1.bf16.msra.mxu0 0
    %426 = vmatprep.subr.bf16.mxu0 0
    %427 = vmatpush1.bf16.msra.mxu0 0
    %428 = vmatprep.subr.bf16.mxu0 0
    %429 = vmatpush1.bf16.msra.mxu0 0
    %430 = vmatprep.subr.bf16.mxu0 0
    %431 = vmatpush1.bf16.msra.mxu0 0
    %432 = vmatprep.subr.bf16.mxu0 0
    %433 = vmatpush1.bf16.msra.mxu0 0
    %434 = vmatprep.subr.bf16.mxu0 0
    %435 = vmatpush1.bf16.msra.mxu0 0
    %436 = vmatprep.subr.bf16.mxu0 0
    %437 = vmatpush1.bf16.msra.mxu0 0
    %438 = vmatprep.subr.bf16.mxu0 0
    %439 = vmatpush1.bf16.msra.mxu0 0
    %440 = vmatprep.subr.bf16.mxu0 0
    %441 = vmatpush1.bf16.msra.mxu0 0
    %442 = vmatprep.subr.bf16.mxu0 0
    %443 = vmatpush1.bf16.msra.mxu0 0
    %444 = vmatprep.subr.bf16.mxu0 0
    %445 = vmatpush1.bf16.msra.mxu0 0
    %446 = vmatprep.subr.bf16.mxu0 0
    %447 = vmatpush1.bf16.msra.mxu0 0
    %448 = vmatprep.subr.bf16.mxu0 0
    %449 = vmatpush1.bf16.msra.mxu0 0
    %450 = vmatprep.subr.bf16.mxu0 0
    %451 = vmatpush1.bf16.msra.mxu0 0
    %452 = vmatprep.mubr.bf16.mxu0 0
    %453 = vmatmul.mubr.bf16.gmra.mrb[0].mxu0 %v397
    %v454 = vpop.f32.mrb[0].mxu0
    %v455 = vadd.f32 0.0, %v454
    %v456 = vpop.f32.mrb[0].mxu0
    %v457 = vpop.f32.mrb[0].mxu0
    %v458 = vadd.f32 0.0, %v457
    %v459 = vpop.f32.mrb[0].mxu0
    %460 = vmatprep.mubr.bf16.mxu0 0
    %461 = vmatmul.mubr.bf16.gmra.mrb[0].mxu0 %v400
    %v462 = vpop.f32.mrb[0].mxu0
    %v463 = vadd.f32 0.0, %v462
    %v464 = vpop.f32.mrb[0].mxu0
    %v465 = vpop.f32.mrb[0].mxu0
    %v466 = vadd.f32 0.0, %v465
    %v467 = vpop.f32.mrb[0].mxu0
    %468 = vmatprep.mubr.bf16.mxu0 0
    %469 = vmatmul.mubr.bf16.gmra.mrb[0].mxu0 %v403
    %v470 = vpop.f32.mrb[0].mxu0
    %v471 = vadd.f32 0.0, %v470
    %v472 = vpop.f32.mrb[0].mxu0
    %v473 = vpop.f32.mrb[0].mxu0
    %v474 = vadd.f32 0.0, %v473
    %v475 = vpop.f32.mrb[0].mxu0
    %476 = vmatprep.mubr.bf16.mxu0 0
    %477 = vmatmul.mubr.bf16.gmra.mrb[0].mxu0 %v406
    %v478 = vpop.f32.mrb[0].mxu0
    %v479 = vadd.f32 0.0, %v478
    %v480 = vpop.f32.mrb[0].mxu0
    %v481 = vpop.f32.mrb[0].mxu0
    %v482 = vadd.f32 0.0, %v481
    %v483 = vpop.f32.mrb[0].mxu0
    %484 = vmatprep.mubr.bf16.mxu0 0
    %485 = vmatmul.mubr.bf16.gmra.mrb[0].mxu0 %v409
    %v486 = vpop.f32.mrb[0].mxu0
    %v487 = vadd.f32 0.0, %v486
    %v488 = vpop.f32.mrb[0].mxu0
    %v489 = vpop.f32.mrb[0].mxu0
    %v490 = vadd.f32 0.0, %v489
    %v491 = vpop.f32.mrb[0].mxu0
    %492 = vmatprep.mubr.bf16.mxu0 0
    %493 = vmatmul.mubr.bf16.gmra.mrb[0].mxu0 %v412
    %v494 = vpop.f32.mrb[0].mxu0
    %v495 = vadd.f32 0.0, %v494
    %v496 = vpop.f32.mrb[0].mxu0
    %v497 = vpop.f32.mrb[0].mxu0
    %v498 = vadd.f32 0.0, %v497
    %v499 = vpop.f32.mrb[0].mxu0
    %500 = vmatprep.mubr.bf16.mxu0 0
    %501 = vmatmul.mubr.bf16.gmra.mrb[0].mxu0 %v415
    %v502 = vpop.f32.mrb[0].mxu0
    %v503 = vadd.f32 0.0, %v502
    %v504 = vpop.f32.mrb[0].mxu0
    %v505 = vpop.f32.mrb[0].mxu0
    %v506 = vadd.f32 0.0, %v505
    %v507 = vpop.f32.mrb[0].mxu0
    %508 = vmatprep.mubr.bf16.mxu0 0
    %509 = vmatmul.mubr.bf16.gmra.mrb[0].mxu0 %v418
    %v510 = vpop.f32.mrb[0].mxu0
    %v511 = vadd.f32 0.0, %v510
    %v512 = vpop.f32.mrb[0].mxu0
    %v513 = vpop.f32.mrb[0].mxu0
    %v514 = vadd.f32 0.0, %v513
    %v515 = vpop.f32.mrb[0].mxu0
    %516 = vdwg.mxu0
    %v517 = vadd.f32 %v334, %v455
    %v518 = vadd.f32 %v337, %v458
    %v519 = vadd.f32 %v342, %v463
    %v520 = vadd.f32 %v345, %v466
    %v521 = vadd.f32 %v350, %v471
    %v522 = vadd.f32 %v353, %v474
    %v523 = vadd.f32 %v358, %v479
    %v524 = vadd.f32 %v361, %v482
    %v525 = vadd.f32 %v366, %v487
    %v526 = vadd.f32 %v369, %v490
    %v527 = vadd.f32 %v374, %v495
    %v528 = vadd.f32 %v377, %v498
    %v529 = vadd.f32 %v382, %v503
    %v530 = vadd.f32 %v385, %v506
    %v531 = vadd.f32 %v390, %v511
    %v532 = vadd.f32 %v393, %v514
    %vm533 = vcmask 261120
    %534 = vst.msk [vmem:[#allocation7] sm:$0xff] %vm533, %v517
    %535 = vst.msk [vmem:[#allocation7 + $0x8] sm:$0xff] %vm533, %v518
    %536 = vst.msk [vmem:[#allocation7 + $0x10] sm:$0xff] %vm533, %v519
    %537 = vst.msk [vmem:[#allocation7 + $0x18] sm:$0xff] %vm533, %v520
    %538 = vst.msk [vmem:[#allocation7 + $0x20] sm:$0xff] %vm533, %v521
    %539 = vst.msk [vmem:[#allocation7 + $0x28] sm:$0xff] %vm533, %v522
    %540 = vst.msk [vmem:[#allocation7 + $0x30] sm:$0xff] %vm533, %v523
    %541 = vst.msk [vmem:[#allocation7 + $0x38] sm:$0xff] %vm533, %v524
    %542 = vst.msk [vmem:[#allocation7 + $0x40] sm:$0xff] %vm533, %v525
    %543 = vst.msk [vmem:[#allocation7 + $0x48] sm:$0xff] %vm533, %v526
    %544 = vst.msk [vmem:[#allocation7 + $0x50] sm:$0xff] %vm533, %v527
    %545 = vst.msk [vmem:[#allocation7 + $0x58] sm:$0xff] %vm533, %v528
    %546 = vst.msk [vmem:[#allocation7 + $0x60] sm:$0xff] %vm533, %v529
    %547 = vst.msk [vmem:[#allocation7 + $0x68] sm:$0xff] %vm533, %v530
    %548 = vst.msk [vmem:[#allocation7 + $0x70] sm:$0xff] %vm533, %v531
    %549 = vst.msk [vmem:[#allocation7 + $0x78] sm:$0xff] %vm533, %v532
    %566 = vrot.lane.b32.xlu0 %v517, 32
    %v567 = vpop.permute.xlu0 %566
    %568 = vrot.lane.b32.xlu0 %v518, 32
    %v569 = vpop.permute.xlu0 %568
    %570 = vrot.lane.b32.xlu0 %v519, 32
    %v571 = vpop.permute.xlu0 %570
    %572 = vrot.lane.b32.xlu0 %v520, 32
    %v573 = vpop.permute.xlu0 %572
    %574 = vrot.lane.b32.xlu0 %v521, 32
    %v575 = vpop.permute.xlu0 %574
    %576 = vrot.lane.b32.xlu0 %v522, 32
    %v577 = vpop.permute.xlu0 %576
    %578 = vrot.lane.b32.xlu0 %v523, 32
    %v579 = vpop.permute.xlu0 %578
    %580 = vrot.lane.b32.xlu0 %v524, 32
    %v581 = vpop.permute.xlu0 %580
    %582 = vrot.lane.b32.xlu0 %v525, 32
    %v583 = vpop.permute.xlu0 %582
    %584 = vrot.lane.b32.xlu0 %v526, 32
    %v585 = vpop.permute.xlu0 %584
    %586 = vrot.lane.b32.xlu0 %v527, 32
    %v587 = vpop.permute.xlu0 %586
    %588 = vrot.lane.b32.xlu0 %v528, 32
    %v589 = vpop.permute.xlu0 %588
    %590 = vrot.lane.b32.xlu0 %v529, 32
    %v591 = vpop.permute.xlu0 %590
    %592 = vrot.lane.b32.xlu0 %v530, 32
    %v593 = vpop.permute.xlu0 %592
    %594 = vrot.lane.b32.xlu0 %v531, 32
    %v595 = vpop.permute.xlu0 %594
    %596 = vrot.lane.b32.xlu0 %v532, 32
    %v597 = vpop.permute.xlu0 %596
    %vm614 = vcmask 523520
    %615 = vst.msk [vmem:[#allocation7] sm:$0xff] %vm614, %v567
    %616 = vst.msk [vmem:[#allocation7 + $0x8] sm:$0xff] %vm614, %v569
    %617 = vst.msk [vmem:[#allocation7 + $0x10] sm:$0xff] %vm614, %v571
    %618 = vst.msk [vmem:[#allocation7 + $0x18] sm:$0xff] %vm614, %v573
    %619 = vst.msk [vmem:[#allocation7 + $0x20] sm:$0xff] %vm614, %v575
    %620 = vst.msk [vmem:[#allocation7 + $0x28] sm:$0xff] %vm614, %v577
    %621 = vst.msk [vmem:[#allocation7 + $0x30] sm:$0xff] %vm614, %v579
    %622 = vst.msk [vmem:[#allocation7 + $0x38] sm:$0xff] %vm614, %v581
    %623 = vst.msk [vmem:[#allocation7 + $0x40] sm:$0xff] %vm614, %v583
    %624 = vst.msk [vmem:[#allocation7 + $0x48] sm:$0xff] %vm614, %v585
    %625 = vst.msk [vmem:[#allocation7 + $0x50] sm:$0xff] %vm614, %v587
    %626 = vst.msk [vmem:[#allocation7 + $0x58] sm:$0xff] %vm614, %v589
    %627 = vst.msk [vmem:[#allocation7 + $0x60] sm:$0xff] %vm614, %v591
    %628 = vst.msk [vmem:[#allocation7 + $0x68] sm:$0xff] %vm614, %v593
    %629 = vst.msk [vmem:[#allocation7 + $0x70] sm:$0xff] %vm614, %v595
    %630 = vst.msk [vmem:[#allocation7 + $0x78] sm:$0xff] %vm614, %v597
    // Predicated region
    $region18: #{tpu_custom_call.1} parent=1 // pred_check
      _
    $region19: #{tpu_custom_call.1} parent=1 // pred_check_branch
      %632 = sbr.rel (0) target = $region21
    $region20: #{tpu_custom_call.1} parent=1 // pred_region
      %s634 = ssub.s32 2048, 2048
      %635 = vsyncadd [#allocation4], %s634
      %s636 = sshll.u32 [#allocation7], 4
      %s637 = int_to_ptr.vmem [resolvable:$true] %s636
      %642 = dma.vmem_to_hbm [thread:$0]  %s637, 2048, %s2, [#allocation4], 128, 128, 8
    $region21: #{tpu_custom_call.1} parent=1 // pred_fallthru
      _
    // Predicated region
    $region22: #{tpu_custom_call.1} parent=1 // pred_check
      _
    $region23: #{tpu_custom_call.1} parent=1 // pred_check_branch
      %644 = sbr.rel (0) target = $region25
    $region24: #{tpu_custom_call.1} parent=1 // pred_region
      %645 = dma.done [#allocation4], 2048
    $region25: #{tpu_custom_call.1} parent=1 // pred_fallthru
      _
    %646 = vsyncpa [#allocation3], 1
    %647 = vsyncpa [#allocation6], 1
    %648 = vsyncpa [#allocation4], 1

</llo_original>
